<compile_context>
chip_gen: v7x
topology: tpu7x:2x2x1
jax: 0.10.0
libtpu: 0.0.40
codegen_flags: <defaults>
</compile_context>

<pallas_src>
import jax
import jax.numpy as jnp
from jax.experimental import pallas as pl
from jax.experimental.pallas import tpu as pltpu


def mlp_kernel(params_ref, x_ref, o_ref):
    # params_ref: SMEM f32[11] = [w1(2x3) row-major, b1(2), w2(1x2), b2(1)]
    # x_ref:      VMEM f32[3, rb, 128]  (features on axis 0, batch on (rb,128))
    # o_ref:      VMEM f32[rb, 128]     (sublane- and lane-dense output tile)
    x0 = x_ref[0]  # (rb, 128) full dense vreg tiles
    x1 = x_ref[1]
    x2 = x_ref[2]

    w00 = params_ref[0]
    w01 = params_ref[1]
    w02 = params_ref[2]
    w10 = params_ref[3]
    w11 = params_ref[4]
    w12 = params_ref[5]
    b0 = params_ref[6]
    b1 = params_ref[7]
    v0 = params_ref[8]
    v1 = params_ref[9]
    c = params_ref[10]

    # Hidden layer: pure VPU multiply-adds on full (8,128)-dense vregs.
    h0 = x0 * w00 + x1 * w01 + x2 * w02 + b0
    h1 = x0 * w10 + x1 * w11 + x2 * w12 + b1

    # ReLU
    a0 = jnp.maximum(h0, 0.0)
    a1 = jnp.maximum(h1, 0.0)

    # Output layer (2 -> 1), dense unmasked store.
    o_ref[...] = (a0 * v0 + a1 * v1 + c).astype(o_ref.dtype)


def mlp_forward(x, w1, b1, w2, b2, *, rb=512):
    """x: (B, 3) f32; w1: (2, 3) PyTorch layout; b1: (2,); w2: (1, 2); b2: (1,).

    Returns (B, 1) f32, matching MLP.forward semantics.
    """
    B = x.shape[0]
    lanes = 128

    # Pack all parameters into one tiny SMEM-resident blob (11 floats).
    params = jnp.concatenate(
        [w1.reshape(-1), b1.reshape(-1), w2.reshape(-1), b2.reshape(-1)]
    ).astype(jnp.float32)

    # Layout: samples packed across (sublane, lane) = (rows, 128).
    rows_needed = pl.cdiv(B, lanes)
    # Clamp the per-block sublane count for small batches (multiple of 8).
    rb = min(rb, max(8, ((rows_needed + 7) // 8) * 8))
    n_blocks = pl.cdiv(rows_needed, rb)
    rows_pad = n_blocks * rb
    B_pad = rows_pad * lanes

    # Single fused pad + transpose + reshape pass over x (one extra HBM pass).
    x_pad = jnp.pad(x.astype(jnp.float32), ((0, B_pad - B), (0, 0)))
    x_t = x_pad.T.reshape(3, rows_pad, lanes)  # (3, rows_pad, 128)

    cost = pl.CostEstimate(
        flops=18 * B_pad,
        transcendentals=0,
        bytes_accessed=16 * B_pad + 11 * 4,
    )

    out = pl.pallas_call(
        mlp_kernel,
        out_shape=jax.ShapeDtypeStruct((rows_pad, lanes), jnp.float32),
        grid=(n_blocks,),
        in_specs=[
            # Packed params: untiled, SMEM-resident across all grid steps.
            pl.BlockSpec(memory_space=pltpu.MemorySpace.SMEM),
            # Activations: (3, rb, 128) blocks marching along the row axis.
            pl.BlockSpec((3, rb, lanes), lambda i: (0, i, 0)),
        ],
        out_specs=pl.BlockSpec((rb, lanes), lambda i: (i, 0)),
        compiler_params=pltpu.CompilerParams(
            dimension_semantics=("parallel",),
        ),
        cost_estimate=cost,
    )(params, x_t)

    # Back to the PyTorch (B, 1) output layout; drop padding.
    return out.reshape(B_pad)[:B].reshape(B, 1)


if __name__ == "__main__":
    key = jax.random.PRNGKey(0)
    kx, kw1, kb1, kw2, kb2 = jax.random.split(key, 5)

    B = 256  # small batch; pads to one (8, 128) block of 1024 samples
    x = jax.random.normal(kx, (B, 3), dtype=jnp.float32)

    # Deterministic parameter init matching nn.Linear's shapes:
    # hidden: weight (2, 3), bias (2); output: weight (1, 2), bias (1).
    bound1 = 1.0 / jnp.sqrt(3.0)
    bound2 = 1.0 / jnp.sqrt(2.0)
    w1 = jax.random.uniform(kw1, (2, 3), jnp.float32, -bound1, bound1)
    b1 = jax.random.uniform(kb1, (2,), jnp.float32, -bound1, bound1)
    w2 = jax.random.uniform(kw2, (1, 2), jnp.float32, -bound2, bound2)
    b2 = jax.random.uniform(kb2, (1,), jnp.float32, -bound2, bound2)

    out = mlp_forward(x, w1, b1, w2, b2)
    jax.block_until_ready(out)

    # Pure-JAX reference check of the forward semantics.
    ref = jnp.maximum(x @ w1.T + b1, 0.0) @ w2.T + b2
    assert out.shape == (B, 1)
    assert jnp.allclose(out, ref, atol=1e-5, rtol=1e-5)

    print("KERNEL_OK")
</pallas_src>

<mosaic_0001>
module attributes {stable_mosaic.version = 11 : i64} {
  func.func @mlp_kernel(%arg0: i32, %arg1: memref<11xf32, #tpu.memory_space<smem>>, %arg2: memref<3x8x128xf32, #tpu.memory_space<vmem>>, %arg3: memref<8x128xf32, #tpu.memory_space<vmem>>) attributes {dimension_semantics = [#tpu.dimension_semantics<parallel>], iteration_bounds = array<i64: 1>, scalar_prefetch = 0 : i64, scratch_operands = 0 : i64, tpu.core_type = #tpu.core_type<tc>, window_params = [{transform_indices = @transform_0, window_bounds = array<i64: 11>}, {transform_indices = @transform_1, window_bounds = array<i64: 3, 8, 128>}, {transform_indices = @transform_2, window_bounds = array<i64: 8, 128>}]} {
    %c0 = arith.constant 0 : index
    %c0_0 = arith.constant 0 : index
    %c0_1 = arith.constant 0 : index
    %0 = vector.load %arg2[%c0, %c0_0, %c0_1] : memref<3x8x128xf32, #tpu.memory_space<vmem>>, vector<1x8x128xf32>
    %1 = vector.shape_cast %0 : vector<1x8x128xf32> to vector<8x128xf32>
    %c1 = arith.constant 1 : index
    %c0_2 = arith.constant 0 : index
    %c0_3 = arith.constant 0 : index
    %2 = vector.load %arg2[%c1, %c0_2, %c0_3] : memref<3x8x128xf32, #tpu.memory_space<vmem>>, vector<1x8x128xf32>
    %3 = vector.shape_cast %2 : vector<1x8x128xf32> to vector<8x128xf32>
    %c2 = arith.constant 2 : index
    %c0_4 = arith.constant 0 : index
    %c0_5 = arith.constant 0 : index
    %4 = vector.load %arg2[%c2, %c0_4, %c0_5] : memref<3x8x128xf32, #tpu.memory_space<vmem>>, vector<1x8x128xf32>
    %5 = vector.shape_cast %4 : vector<1x8x128xf32> to vector<8x128xf32>
    %c0_6 = arith.constant 0 : index
    %6 = memref.load %arg1[%c0_6] : memref<11xf32, #tpu.memory_space<smem>>
    %c1_7 = arith.constant 1 : index
    %7 = memref.load %arg1[%c1_7] : memref<11xf32, #tpu.memory_space<smem>>
    %c2_8 = arith.constant 2 : index
    %8 = memref.load %arg1[%c2_8] : memref<11xf32, #tpu.memory_space<smem>>
    %c3 = arith.constant 3 : index
    %9 = memref.load %arg1[%c3] : memref<11xf32, #tpu.memory_space<smem>>
    %c4 = arith.constant 4 : index
    %10 = memref.load %arg1[%c4] : memref<11xf32, #tpu.memory_space<smem>>
    %c5 = arith.constant 5 : index
    %11 = memref.load %arg1[%c5] : memref<11xf32, #tpu.memory_space<smem>>
    %c6 = arith.constant 6 : index
    %12 = memref.load %arg1[%c6] : memref<11xf32, #tpu.memory_space<smem>>
    %c7 = arith.constant 7 : index
    %13 = memref.load %arg1[%c7] : memref<11xf32, #tpu.memory_space<smem>>
    %c8 = arith.constant 8 : index
    %14 = memref.load %arg1[%c8] : memref<11xf32, #tpu.memory_space<smem>>
    %c9 = arith.constant 9 : index
    %15 = memref.load %arg1[%c9] : memref<11xf32, #tpu.memory_space<smem>>
    %c10 = arith.constant 10 : index
    %16 = memref.load %arg1[%c10] : memref<11xf32, #tpu.memory_space<smem>>
    %17 = vector.broadcast %6 : f32 to vector<8x128xf32>
    %18 = arith.mulf %1, %17 : vector<8x128xf32>
    %19 = vector.broadcast %7 : f32 to vector<8x128xf32>
    %20 = arith.mulf %3, %19 : vector<8x128xf32>
    %21 = arith.addf %18, %20 : vector<8x128xf32>
    %22 = vector.broadcast %8 : f32 to vector<8x128xf32>
    %23 = arith.mulf %5, %22 : vector<8x128xf32>
    %24 = arith.addf %21, %23 : vector<8x128xf32>
    %25 = vector.broadcast %12 : f32 to vector<8x128xf32>
    %26 = arith.addf %24, %25 : vector<8x128xf32>
    %27 = vector.broadcast %9 : f32 to vector<8x128xf32>
    %28 = arith.mulf %1, %27 : vector<8x128xf32>
    %29 = vector.broadcast %10 : f32 to vector<8x128xf32>
    %30 = arith.mulf %3, %29 : vector<8x128xf32>
    %31 = arith.addf %28, %30 : vector<8x128xf32>
    %32 = vector.broadcast %11 : f32 to vector<8x128xf32>
    %33 = arith.mulf %5, %32 : vector<8x128xf32>
    %34 = arith.addf %31, %33 : vector<8x128xf32>
    %35 = vector.broadcast %13 : f32 to vector<8x128xf32>
    %36 = arith.addf %34, %35 : vector<8x128xf32>
    %cst = arith.constant 0.000000e+00 : f32
    %37 = vector.broadcast %cst : f32 to vector<8x128xf32>
    %38 = arith.maximumf %26, %37 : vector<8x128xf32>
    %cst_9 = arith.constant 0.000000e+00 : f32
    %39 = vector.broadcast %cst_9 : f32 to vector<8x128xf32>
    %40 = arith.maximumf %36, %39 : vector<8x128xf32>
    %41 = vector.broadcast %14 : f32 to vector<8x128xf32>
    %42 = arith.mulf %38, %41 : vector<8x128xf32>
    %43 = vector.broadcast %15 : f32 to vector<8x128xf32>
    %44 = arith.mulf %40, %43 : vector<8x128xf32>
    %45 = arith.addf %42, %44 : vector<8x128xf32>
    %46 = vector.broadcast %16 : f32 to vector<8x128xf32>
    %47 = arith.addf %45, %46 : vector<8x128xf32>
    %c0_10 = arith.constant 0 : index
    %c0_11 = arith.constant 0 : index
    %48 = vector.load %arg3[%c0_10, %c0_11] : memref<8x128xf32, #tpu.memory_space<vmem>>, vector<8x128xf32>
    tpu.vector_store %arg3[%c0_10, %c0_11], %47 {strides = array<i32>} : memref<8x128xf32, #tpu.memory_space<vmem>>, vector<8x128xf32>,
    return
  }
  func.func @transform_0(%arg0: i32) -> i32 {
    %c0_i32 = arith.constant 0 : i32
    %c0_i32_0 = arith.constant 0 : i32
    return %c0_i32 : i32
  }
  func.func @transform_1(%arg0: i32) -> (i32, i32, i32) {
    %c0_i32 = arith.constant 0 : i32
    %c0_i32_0 = arith.constant 0 : i32
    %c0_i32_1 = arith.constant 0 : i32
    return %c0_i32, %arg0, %c0_i32_0 : i32, i32, i32
  }
  func.func @transform_2(%arg0: i32) -> (i32, i32) {
    %c0_i32 = arith.constant 0 : i32
    %c0_i32_0 = arith.constant 0 : i32
    return %arg0, %c0_i32 : i32, i32
  }
}

</mosaic_0001>

<llo_original>
// kernel: tpu_custom_call.1
$region0: #{tpu_custom_call.1}
  #allocation0 [shape = 'u32[]', space=smem, size = 0x4, offset = 0x4, fixed_abs, tag = 'smem constant byte address 0x4 - core index']
  #allocation1 [shape = 'u32[144,128]{1,0:T(1,128)}', space=vmem, size = 0x12000, scoped, tag = 'internal scratch']
  %s0 = inlined_call_operand.hbm [shape: f32[11], index: 0, kind: input, shape index: {}]
  %s1 = inlined_call_operand.hbm [shape: f32[3,8,128], index: 1, kind: input, shape index: {}]
  %s2 = inlined_call_operand.hbm [shape: f32[8,128], index: 2, kind: output, shape index: {}]
  %s3 = sld [smem:[#allocation0]]
  $region26: #{tpu_custom_call.1} parent=0
    _
  %s5 = ssub.s32 1, %s3
  %s6 = scalar_select 0, %s5, %s3
  $region1: #{tpu_custom_call.1} parent=0
    #allocation2 [shape = 'u8[512]{0}', space=smem, size = 0x200, scoped, tag = 'input window, operand 0, single buffered']
    #allocation3 [shape = 's32[1]{0}', space=sflag, size = 0x4, scoped, tag = 'scoped memory for tpu_custom_call.1']
    #allocation4 [shape = 's32[1]{0}', space=sflag, size = 0x4, scoped, tag = 'scoped memory for tpu_custom_call.1']
    #allocation5 [shape = 's32[1]{0}', space=sflag, size = 0x4, scoped, tag = 'scoped memory for tpu_custom_call.1']
    #allocation6 [shape = 'u8[12288]{0}', space=vmem, size = 0x3000, scoped, tag = 'input window, operand 1, single buffered']
    #allocation7 [shape = 'u8[4096]{0}', space=vmem, size = 0x1000, scoped, tag = 'output window, operand 0, single buffered']
    %7 = vsyncpa [#allocation5], 0
    %8 = vsyncpa [#allocation3], 0
    %9 = vsyncpa [#allocation4], 0
    // Predicated region
    $region2: #{tpu_custom_call.1} parent=1 // pred_check
      _
    $region3: #{tpu_custom_call.1} parent=1 // pred_check_branch
      %11 = sbr.rel (0) target = $region5
    $region4: #{tpu_custom_call.1} parent=1 // pred_region
      %s13 = ssub.s32 16, 16
      %14 = vsyncadd [#allocation5], %s13
      %17 = dma.hbm_to_smem %s0, 16, [#allocation2], [#allocation5]
    $region5: #{tpu_custom_call.1} parent=1 // pred_fallthru
      _
    // Predicated region
    $region6: #{tpu_custom_call.1} parent=1 // pred_check
      _
    $region7: #{tpu_custom_call.1} parent=1 // pred_check_branch
      %19 = sbr.rel (0) target = $region9
    $region8: #{tpu_custom_call.1} parent=1 // pred_region
      %s21 = ssub.s32 384, 384
      %22 = vsyncadd [#allocation3], %s21
      %s23 = sshll.u32 [#allocation6], 4
      %s24 = int_to_ptr.vmem [resolvable:$true] %s23
      %29 = dma.hbm_to_vmem [thread:$0]  %s1, 384, %s24, [#allocation3], 128, 128, 8
    $region9: #{tpu_custom_call.1} parent=1 // pred_fallthru
      _
    // Predicated region
    $region10: #{tpu_custom_call.1} parent=1 // pred_check
      _
    $region11: #{tpu_custom_call.1} parent=1 // pred_check_branch
      %31 = sbr.rel (0) target = $region13
    $region12: #{tpu_custom_call.1} parent=1 // pred_region
      %32 = dma.done [#allocation5], 16
    $region13: #{tpu_custom_call.1} parent=1 // pred_fallthru
      _
    // Predicated region
    $region14: #{tpu_custom_call.1} parent=1 // pred_check
      _
    $region15: #{tpu_custom_call.1} parent=1 // pred_check_branch
      %34 = sbr.rel (0) target = $region17
    $region16: #{tpu_custom_call.1} parent=1 // pred_region
      %35 = dma.done [#allocation3], 384
    $region17: #{tpu_custom_call.1} parent=1 // pred_fallthru
      _
    %36 = sfence
    %v37 = vld [vmem:[#allocation6] sm:$0xff]
    %s38 = scalar_lea.vmem [#allocation6], 8
    %v39 = vld [vmem:[%s38] sm:$0xff]
    %s40 = scalar_lea.vmem [#allocation6], 16
    %v41 = vld [vmem:[%s40] sm:$0xff]
    %s42 = sld [smem:[#allocation2]]
    %s43 = sld [smem:[#allocation2 + $0x1]]
    %s44 = sld [smem:[#allocation2 + $0x2]]
    %s45 = sld [smem:[#allocation2 + $0x3]]
    %s46 = sld [smem:[#allocation2 + $0x4]]
    %s47 = sld [smem:[#allocation2 + $0x5]]
    %s48 = sld [smem:[#allocation2 + $0x6]]
    %s49 = sld [smem:[#allocation2 + $0x7]]
    %s50 = sld [smem:[#allocation2 + $0x8]]
    %s51 = sld [smem:[#allocation2 + $0x9]]
    %s52 = sld [smem:[#allocation2 + $0xa]]
    %v53 = vstv %s42
    %v54 = vmul.f32 %v37, %v53
    %v55 = vstv %s43
    %v56 = vmul.f32 %v39, %v55
    %v57 = vadd.f32 %v54, %v56
    %v58 = vstv %s44
    %v59 = vmul.f32 %v41, %v58
    %v60 = vadd.f32 %v57, %v59
    %v61 = vstv %s48
    %v62 = vadd.f32 %v60, %v61
    %v63 = vstv %s45
    %v64 = vmul.f32 %v37, %v63
    %v65 = vstv %s46
    %v66 = vmul.f32 %v39, %v65
    %v67 = vadd.f32 %v64, %v66
    %v68 = vstv %s47
    %v69 = vmul.f32 %v41, %v68
    %v70 = vadd.f32 %v67, %v69
    %v71 = vstv %s49
    %v72 = vadd.f32 %v70, %v71
    %v73 = vmax.f32 %v62, 0.0
    %v74 = vmax.f32 %v72, 0.0
    %v75 = vstv %s50
    %v76 = vmul.f32 %v73, %v75
    %v77 = vstv %s51
    %v78 = vmul.f32 %v74, %v77
    %v79 = vadd.f32 %v76, %v78
    %v80 = vstv %s52
    %v81 = vadd.f32 %v79, %v80
    %82 = vst [vmem:[#allocation7] sm:$0xff] %v81
    // Predicated region
    $region18: #{tpu_custom_call.1} parent=1 // pred_check
      _
    $region19: #{tpu_custom_call.1} parent=1 // pred_check_branch
      %84 = sbr.rel (0) target = $region21
    $region20: #{tpu_custom_call.1} parent=1 // pred_region
      %s86 = ssub.s32 128, 128
      %87 = vsyncadd [#allocation4], %s86
      %s89 = sshll.u32 [#allocation7], 4
      %s90 = int_to_ptr.vmem [resolvable:$true] %s89
      %92 = dma.vmem_to_hbm [thread:$0]  %s90, 128, %s2, [#allocation4]
    $region21: #{tpu_custom_call.1} parent=1 // pred_fallthru
      _
    // Predicated region
    $region22: #{tpu_custom_call.1} parent=1 // pred_check
      _
    $region23: #{tpu_custom_call.1} parent=1 // pred_check_branch
      %94 = sbr.rel (0) target = $region25
    $region24: #{tpu_custom_call.1} parent=1 // pred_region
      %95 = dma.done [#allocation4], 128
    $region25: #{tpu_custom_call.1} parent=1 // pred_fallthru
      _
    %96 = vsyncpa [#allocation3], 1
    %97 = vsyncpa [#allocation4], 1
    %98 = vsyncpa [#allocation5], 1

</llo_original>
